<compile_context>
chip_gen: v7x
topology: tpu7x:2x2x1
jax: 0.10.0
libtpu: 0.0.40
codegen_flags: <defaults>
</compile_context>

<pallas_src>
import functools

import jax
import jax.numpy as jnp
from jax.experimental import pallas as pl
from jax.experimental.pallas import tpu as pltpu

_LANES = 128
_SUBLANES = 8
_MAX_BLOCK_ROWS = 8192   # 8192 x 128 f32 = 4 MiB / block, 8 MiB double-buffered
_SUB_ROWS = 256          # in-block reduce chunk: 256 x 128 f32 = 32 vregs live


def _row_chunks(block_rows, sub_rows):
    """Static (offset, size) pairs covering [0, block_rows); sizes are *8."""
    chunks, off = [], 0
    while off < block_rows:
        size = min(sub_rows, block_rows - off)
        chunks.append((off, size))
        off += size
    return chunks


def _num_tensorcores():
    """Best-effort TensorCores-per-chip (2 on v7x, 1 on v5e/v6e)."""
    try:
        info = pltpu.get_tpu_info()
    except Exception:
        return 1
    for name in ("num_cores", "cores_per_chip", "core_count",
                 "num_tensorcores", "tensorcore_count"):
        val = getattr(info, name, None)
        if isinstance(val, int) and val >= 1:
            return val
    return 1


def _adv_loss_kernel(x_ref, o_ref, *, block_rows, sub_rows, rows_per_chunk,
                     valid_rows, need_mask):
    p = pl.program_id(0)   # TensorCore chunk (size 1 on single-TC chips)
    t = pl.program_id(1)   # sequential block within the chunk

    @pl.when(t == 0)
    def _():
        o_ref[...] = jnp.zeros_like(o_ref)

    chunks = _row_chunks(block_rows, sub_rows)

    def accumulate(row0, masked):
        # Chunked load -> log (EUP) -> vreg add (VPU); live set stays tiny.
        acc = jnp.zeros((_SUBLANES, _LANES), jnp.float32)
        for off, size in chunks:
            xb = x_ref[pl.ds(off, size), :].astype(jnp.float32)
            if masked:
                # Mask BEFORE the log: invalid/OOB rows -> 1.0 -> log == 0.
                rid = jax.lax.broadcasted_iota(jnp.int32, xb.shape, 0)
                rid = rid + (row0 + off)
                xb = jnp.where(rid < valid_rows, xb, jnp.float32(1.0))
            logs = jnp.log(xb).reshape(size // _SUBLANES, _SUBLANES, _LANES)
            acc = acc + jnp.sum(logs, axis=0)
        return acc

    if need_mask:
        block_start = p * rows_per_chunk + t * block_rows
        is_ragged = block_start + block_rows > valid_rows

        @pl.when(jnp.logical_not(is_ragged))
        def _():
            o_ref[...] += accumulate(0, masked=False)

        @pl.when(is_ragged)
        def _():
            o_ref[...] += accumulate(block_start, masked=True)
    else:
        o_ref[...] += accumulate(0, masked=False)


def adversarial_loss(x):
    """sum(-log(x)) over all elements, computed with a Pallas TPU kernel."""
    flat = jnp.reshape(x, (-1,))
    n = flat.shape[0]
    if n == 0:
        return jnp.zeros((), jnp.float32)

    chunk = _SUBLANES * _LANES                       # 1024-element alignment
    n_aligned = (n // chunk) * chunk

    tail_loss = None
    if n_aligned < n:
        # <1024-element ragged tail: plain jnp, no full-array copy.
        tail_loss = -jnp.sum(jnp.log(flat[n_aligned:].astype(jnp.float32)))
    if n_aligned == 0:
        return tail_loss

    slab = jnp.reshape(flat[:n_aligned], (-1, _LANES))   # free metadata reshape
    rows = slab.shape[0]                                 # multiple of 8

    block_rows = min(_MAX_BLOCK_ROWS, rows)              # multiple of 8
    num_blocks = pl.cdiv(rows, block_rows)

    num_parallel = max(1, min(_num_tensorcores(), num_blocks))
    blocks_per_chunk = pl.cdiv(num_blocks, num_parallel)
    rows_per_chunk = blocks_per_chunk * block_rows
    covered_blocks = num_parallel * blocks_per_chunk
    need_mask = (num_parallel * rows_per_chunk) != rows

    if covered_blocks == num_blocks:
        def x_index_map(p, t):
            return (p * blocks_per_chunk + t, 0)
    else:
        def x_index_map(p, t):
            # Clamp so an uneven split never indexes past the last block; the
            # in-kernel mask zeroes the duplicated contribution.
            return (jnp.minimum(p * blocks_per_chunk + t, num_blocks - 1), 0)

    if num_parallel > 1:
        # Only CORE_PARALLEL reliably shards across TensorCores (v7x).
        dim_sem = (getattr(pltpu, "CORE_PARALLEL", "parallel"),
                   getattr(pltpu, "ARBITRARY", "arbitrary"))
    else:
        dim_sem = ("parallel", "arbitrary")

    kernel = functools.partial(
        _adv_loss_kernel,
        block_rows=block_rows,
        sub_rows=_SUB_ROWS,
        rows_per_chunk=rows_per_chunk,
        valid_rows=rows,
        need_mask=need_mask,
    )

    itemsize = jnp.dtype(slab.dtype).itemsize
    partials = pl.pallas_call(
        kernel,
        out_shape=jax.ShapeDtypeStruct(
            (num_parallel, _SUBLANES, _LANES), jnp.float32),
        grid_spec=pltpu.PrefetchScalarGridSpec(
            num_scalar_prefetch=0,
            grid=(num_parallel, blocks_per_chunk),
            in_specs=[pl.BlockSpec((block_rows, _LANES), x_index_map)],
            out_specs=pl.BlockSpec((None, _SUBLANES, _LANES),
                                   lambda p, t: (p, 0, 0)),
        ),
        compiler_params=pltpu.CompilerParams(dimension_semantics=dim_sem),
        cost_estimate=pl.CostEstimate(
            flops=rows * _LANES,
            transcendentals=rows * _LANES,
            bytes_accessed=rows * _LANES * itemsize
            + num_parallel * _SUBLANES * _LANES * 4),
    )(slab)

    # Single final cross-lane/sublane reduce; negation hoisted out of the loop.
    loss = -jnp.sum(partials)
    if tail_loss is not None:
        loss = loss + tail_loss
    return loss


if __name__ == "__main__":
    key = jax.random.PRNGKey(0)

    # Small NCHW-like input; values strictly positive so log is well-defined
    # (matches typical use: x are discriminator probabilities in (0, 1)).
    x = jax.random.uniform(
        key, (2, 4, 16, 16), dtype=jnp.float32, minval=0.05, maxval=0.95
    )
    result = adversarial_loss(x)
    jax.block_until_ready(result)
    ref = jnp.sum(-jnp.log(x))
    assert jnp.allclose(result, ref, rtol=1e-5, atol=1e-4), (result, ref)

    # Ragged-size sanity check (exercises the aligned-prefix + jnp-tail path).
    key2 = jax.random.PRNGKey(0)
    y = jax.random.uniform(
        key2, (2348,), dtype=jnp.float32, minval=0.05, maxval=0.95
    )
    result2 = adversarial_loss(y)
    jax.block_until_ready(result2)
    ref2 = jnp.sum(-jnp.log(y))
    assert jnp.allclose(result2, ref2, rtol=1e-5, atol=1e-4), (result2, ref2)

    print("KERNEL_OK")
</pallas_src>

<mosaic_0001>
module attributes {stable_mosaic.version = 11 : i64} {
  func.func @_adv_loss_kernel(%arg0: i32, %arg1: i32, %arg2: memref<16x128xf32, #tpu.memory_space<vmem>>, %arg3: memref<1x8x128xf32, #tpu.memory_space<vmem>>) attributes {dimension_semantics = [#tpu.dimension_semantics<parallel>, #tpu.dimension_semantics<arbitrary>], iteration_bounds = array<i64: 1, 1>, scalar_prefetch = 0 : i64, scratch_operands = 0 : i64, tpu.core_type = #tpu.core_type<tc>, window_params = [{transform_indices = @transform_0, window_bounds = array<i64: 16, 128>}, {transform_indices = @transform_1, window_bounds = array<i64: 1, 8, 128>}]} {
    %c0_i32 = arith.constant 0 : i32
    %0 = arith.cmpi eq, %arg1, %c0_i32 : i32
    %1 = arith.extui %0 : i1 to i32
    %c0_i32_0 = arith.constant 0 : i32
    %2 = arith.cmpi ne, %1, %c0_i32_0 : i32
    scf.if %2 {
      %cst_9 = arith.constant 0.000000e+00 : f32
      %15 = vector.broadcast %cst_9 : f32 to vector<8x128xf32>
      %c0_10 = arith.constant 0 : index
      %c0_11 = arith.constant 0 : index
      %c0_12 = arith.constant 0 : index
      %16 = vector.load %arg3[%c0_10, %c0_11, %c0_12] : memref<1x8x128xf32, #tpu.memory_space<vmem>>, vector<1x8x128xf32>
      %17 = vector.shape_cast %16 : vector<1x8x128xf32> to vector<8x128xf32>
      %18 = vector.shape_cast %15 : vector<8x128xf32> to vector<1x8x128xf32>
      tpu.vector_store %arg3[%c0_10, %c0_11, %c0_12], %18 {strides = array<i32>} : memref<1x8x128xf32, #tpu.memory_space<vmem>>, vector<1x8x128xf32>,
    } else {
    }
    %c0 = arith.constant 0 : index
    %c0_1 = arith.constant 0 : index
    %c0_2 = arith.constant 0 : index
    %3 = vector.load %arg3[%c0, %c0_1, %c0_2] : memref<1x8x128xf32, #tpu.memory_space<vmem>>, vector<1x8x128xf32>
    %4 = vector.shape_cast %3 : vector<1x8x128xf32> to vector<8x128xf32>
    %cst = arith.constant 0.000000e+00 : f32
    %5 = vector.broadcast %cst : f32 to vector<8x128xf32>
    %c0_3 = arith.constant 0 : index
    %c0_4 = arith.constant 0 : index
    %6 = vector.load %arg2[%c0_3, %c0_4] : memref<16x128xf32, #tpu.memory_space<vmem>>, vector<16x128xf32>
    %7 = math.log %6 : vector<16x128xf32>
    %8 = vector.shape_cast %7 : vector<16x128xf32> to vector<2x8x128xf32>
    %cst_5 = arith.constant dense<0.000000e+00> : vector<8x128xf32>
    %9 = vector.multi_reduction <add>, %8, %cst_5 [0] : vector<2x8x128xf32> to vector<8x128xf32>
    %10 = arith.addf %5, %9 : vector<8x128xf32>
    %11 = arith.addf %4, %10 : vector<8x128xf32>
    %c0_6 = arith.constant 0 : index
    %c0_7 = arith.constant 0 : index
    %c0_8 = arith.constant 0 : index
    %12 = vector.load %arg3[%c0_6, %c0_7, %c0_8] : memref<1x8x128xf32, #tpu.memory_space<vmem>>, vector<1x8x128xf32>
    %13 = vector.shape_cast %12 : vector<1x8x128xf32> to vector<8x128xf32>
    %14 = vector.shape_cast %11 : vector<8x128xf32> to vector<1x8x128xf32>
    tpu.vector_store %arg3[%c0_6, %c0_7, %c0_8], %14 {strides = array<i32>} : memref<1x8x128xf32, #tpu.memory_space<vmem>>, vector<1x8x128xf32>,
    return
  }
  func.func @transform_0(%arg0: i32, %arg1: i32) -> (i32, i32) {
    %c1_i32 = arith.constant 1 : i32
    %0 = arith.muli %arg0, %c1_i32 : i32
    %1 = arith.addi %0, %arg1 : i32
    %c0_i32 = arith.constant 0 : i32
    %c0_i32_0 = arith.constant 0 : i32
    return %1, %c0_i32 : i32, i32
  }
  func.func @transform_1(%arg0: i32, %arg1: i32) -> (i32, i32, i32) {
    %c0_i32 = arith.constant 0 : i32
    %c0_i32_0 = arith.constant 0 : i32
    %c0_i32_1 = arith.constant 0 : i32
    return %arg0, %c0_i32, %c0_i32_0 : i32, i32, i32
  }
}

</mosaic_0001>

<llo_original>
// kernel: tpu_custom_call.1
$region0: #{tpu_custom_call.1}
  #allocation0 [shape = 'u32[]', space=smem, size = 0x4, offset = 0x4, fixed_abs, tag = 'smem constant byte address 0x4 - core index']
  #allocation1 [shape = 'u32[144,128]{1,0:T(1,128)}', space=vmem, size = 0x12000, scoped, tag = 'internal scratch']
  %s0 = inlined_call_operand.hbm [shape: f32[16,128], index: 0, kind: input, shape index: {}]
  %s1 = inlined_call_operand.hbm [shape: f32[1,8,128], index: 1, kind: output, shape index: {}]
  %s2 = sld [smem:[#allocation0]]
  $region22: #{tpu_custom_call.1} parent=0
    _
  %s4 = ssub.s32 1, %s2
  %s5 = scalar_select 0, %s4, %s2
  $region1: #{tpu_custom_call.1} parent=0
    #allocation2 [shape = 'u8[8192]{0}', space=vmem, size = 0x2000, scoped, tag = 'input window, operand 0, single buffered']
    #allocation3 [shape = 's32[1]{0}', space=sflag, size = 0x4, scoped, tag = 'scoped memory for tpu_custom_call.1']
    #allocation4 [shape = 's32[1]{0}', space=sflag, size = 0x4, scoped, tag = 'scoped memory for tpu_custom_call.1']
    #allocation5 [shape = 'u8[4096]{0}', space=vmem, size = 0x1000, scoped, tag = 'output window, operand 0, single buffered']
    %6 = vsyncpa [#allocation3], 0
    %7 = vsyncpa [#allocation4], 0
    // Predicated region
    $region2: #{tpu_custom_call.1} parent=1 // pred_check
      _
    $region3: #{tpu_custom_call.1} parent=1 // pred_check_branch
      %9 = sbr.rel (0) target = $region5
    $region4: #{tpu_custom_call.1} parent=1 // pred_region
      %s10 = sadd.s32 0, 0
      %s11 = smul.u32 2, %s10
      %s13 = ssub.s32 256, 256
      %14 = vsyncadd [#allocation3], %s13
      %s15 = smul.addr %s11, 128
      %s16 = scalar_lea.hbm %s0, %s15
      %s17 = sshll.u32 [#allocation2], 4
      %s18 = int_to_ptr.vmem [resolvable:$true] %s17
      %23 = dma.hbm_to_vmem [thread:$0]  %s16, 256, %s18, [#allocation3], 128, 128, 8
    $region5: #{tpu_custom_call.1} parent=1 // pred_fallthru
      _
    // Predicated region
    $region6: #{tpu_custom_call.1} parent=1 // pred_check
      _
    $region7: #{tpu_custom_call.1} parent=1 // pred_check_branch
      %25 = sbr.rel (0) target = $region9
    $region8: #{tpu_custom_call.1} parent=1 // pred_region
      %26 = dma.done [#allocation3], 256
    $region9: #{tpu_custom_call.1} parent=1 // pred_fallthru
      _
    %s27 = sadd.s32 0, 0
    %s28 = smul.u32 2, %s27
    %p29 = scmp.eq.s32.totalorder 0, 0
    // Predicated region
    $region10: #{tpu_custom_call.1} parent=1 // pred_check
      %p30 = pneg %p29
    $region11: #{tpu_custom_call.1} parent=1 // pred_check_branch
      %32 = sbr.rel (%p30) target = $region13
    $region12: #{tpu_custom_call.1} parent=1 // pred_region
      %33 = vst [vmem:[#allocation5] sm:$0xff] 0.0
    $region13: #{tpu_custom_call.1} parent=1 // pred_fallthru
      _
    %v34 = vld [vmem:[#allocation5] sm:$0xff]
    %v35 = vld [vmem:[#allocation2] sm:$0xff]
    %v36 = vld [vmem:[#allocation2 + $0x8] sm:$0xff]
    %v37 = vlog2.pop %v35
    %v38 = vmul.f32 %v37, 0.6931472
    %v39 = vlog2.pop %v36
    %v40 = vmul.f32 %v39, 0.6931472
    %v41 = vadd.f32 %v38, %v40
    %v42 = vadd.f32 %v41, 0.0
    %v43 = vadd.f32 %v34, %v42
    %44 = vst [vmem:[#allocation5] sm:$0xff] %v43
    // Predicated region
    $region14: #{tpu_custom_call.1} parent=1 // pred_check
      _
    $region15: #{tpu_custom_call.1} parent=1 // pred_check_branch
      %46 = sbr.rel (0) target = $region17
    $region16: #{tpu_custom_call.1} parent=1 // pred_region
      %s48 = ssub.s32 128, 128
      %49 = vsyncadd [#allocation4], %s48
      %s51 = sshll.u32 [#allocation5], 4
      %s52 = int_to_ptr.vmem [resolvable:$true] %s51
      %54 = dma.vmem_to_hbm [thread:$0]  %s52, 128, %s1, [#allocation4]
    $region17: #{tpu_custom_call.1} parent=1 // pred_fallthru
      _
    // Predicated region
    $region18: #{tpu_custom_call.1} parent=1 // pred_check
      _
    $region19: #{tpu_custom_call.1} parent=1 // pred_check_branch
      %56 = sbr.rel (0) target = $region21
    $region20: #{tpu_custom_call.1} parent=1 // pred_region
      %57 = dma.done [#allocation4], 128
    $region21: #{tpu_custom_call.1} parent=1 // pred_fallthru
      _
    %58 = vsyncpa [#allocation3], 1
    %59 = vsyncpa [#allocation4], 1

</llo_original>
